<compile_context>
chip_gen: v5e
topology: v5e:2x2
jax: 0.10.0
libtpu: 0.0.40
codegen_flags: <defaults>
</compile_context>

<pallas_src>
import jax
import jax.numpy as jnp
from jax.experimental import pallas as pl
from jax.experimental.pallas import tpu as pltpu

H = 128   # lane-dense padded hidden width (original 100); fc5 output padded to 128 cols


def mlp_kernel(x_ref,
               w1_ref, b1_ref,
               w2_ref, b2_ref,
               w3_ref, b3_ref,
               w4_ref, b4_ref,
               w5_ref, b5_ref,
               o_ref):
    """One grid step processes one (TM, 2) batch tile; weights/biases are VMEM resident."""
    x = x_ref[...]                                       # (TM, 2) f32

    # ---- fc1: K=2 contraction on the VPU (two broadcast FMAs, no MXU fill/drain) ----
    h = (x[:, 0:1] * w1_ref[0:1, :]
         + x[:, 1:2] * w1_ref[1:2, :]
         + b1_ref[...])                                  # (TM, H) f32
    h = jnp.maximum(h, 0.0)

    # ---- fc2..fc4: bf16 MXU matmuls, f32 accumulation, f32 bias + ReLU ----
    h = jnp.dot(h.astype(jnp.bfloat16), w2_ref[...],
                preferred_element_type=jnp.float32) + b2_ref[...]
    h = jnp.maximum(h, 0.0)
    h = jnp.dot(h.astype(jnp.bfloat16), w3_ref[...],
                preferred_element_type=jnp.float32) + b3_ref[...]
    h = jnp.maximum(h, 0.0)
    h = jnp.dot(h.astype(jnp.bfloat16), w4_ref[...],
                preferred_element_type=jnp.float32) + b4_ref[...]
    h = jnp.maximum(h, 0.0)

    # ---- fc5: no ReLU; only column 0 of the padded (TM, H) result is real ----
    h = jnp.dot(h.astype(jnp.bfloat16), w5_ref[...],
                preferred_element_type=jnp.float32) + b5_ref[...]

    # Lane-dense writeback: store the real column-0 values as one (1, TM) row.
    # The (TM, H) -> (H, TM) transpose goes to the otherwise-idle XLU; HBM write
    # traffic per row shrinks from 512 B to 4 B.
    o_ref[...] = jnp.transpose(h)[0:1, :].astype(o_ref.dtype)


def _round_up(n, m):
    return ((n + m - 1) // m) * m


def _pad2(a, rows, cols):
    return jnp.pad(a, ((0, rows - a.shape[0]), (0, cols - a.shape[1])))


def _choose_tile(B):
    """Return (TM, pB). Small batches: one exact tile (no wasted compute).
    Large batches: TM multiple of 128 in [128, 1024], >=4 grid steps so the
    'parallel' batch axis can be split across both TensorCores on v7x."""
    pB8 = _round_up(max(B, 1), 8)
    if pB8 <= 256:
        return pB8, pB8
    tm = _round_up(-(-pB8 // 4), 128)     # ceil(pB8/4) rounded up to 128
    tm = max(128, min(1024, tm))
    pB = _round_up(B, tm)
    return tm, pB


def net_forward(x, params):
    """x: (B, 2) f32; params: 5 tuples (W of shape (in, out), b of shape (1, out)),
    i.e. PyTorch weights pre-transposed so each layer is h @ W + b."""
    B = x.shape[0]
    TM, pB = _choose_tile(B)
    grid = (pB // TM,)

    (w1, b1), (w2, b2), (w3, b3), (w4, b4), (w5, b5) = params

    # Zero-pad to lane-dense shapes (zeros propagate exactly through matmul/ReLU;
    # column 0 of the padded fc5 output is the real scalar).
    xp = jnp.pad(x, ((0, pB - B), (0, 0)))               # (pB, 2), no feature padding
    w1p = _pad2(w1, 2, H).astype(jnp.float32)             # stays f32 (VPU path)
    w2p = _pad2(w2, H, H).astype(jnp.bfloat16)
    w3p = _pad2(w3, H, H).astype(jnp.bfloat16)
    w4p = _pad2(w4, H, H).astype(jnp.bfloat16)
    w5p = _pad2(w5, H, H).astype(jnp.bfloat16)
    b1p = _pad2(b1, 1, H).astype(jnp.float32)
    b2p = _pad2(b2, 1, H).astype(jnp.float32)
    b3p = _pad2(b3, 1, H).astype(jnp.float32)
    b4p = _pad2(b4, 1, H).astype(jnp.float32)
    b5p = _pad2(b5, 1, H).astype(jnp.float32)

    def resident(shape):   # weights/biases stay VMEM-resident across grid steps
        return pl.BlockSpec(shape, lambda i: (0, 0))

    # Advisory cost hint for XLA scheduling (post output-writeback fix).
    flops = 2 * pB * (2 * H + 4 * H * H)
    bytes_accessed = pB * 2 * 4 + pB * 4 + 2 * H * 4 + 5 * H * 4 + 4 * H * H * 2
    cost = pl.CostEstimate(flops=flops, transcendentals=0,
                           bytes_accessed=bytes_accessed)

    out = pl.pallas_call(
        mlp_kernel,
        out_shape=jax.ShapeDtypeStruct((1, pB), jnp.float32),
        grid=grid,
        in_specs=[
            pl.BlockSpec((TM, 2), lambda i: (i, 0)),      # batch-tiled input
            resident(w1p.shape), resident(b1p.shape),
            resident(w2p.shape), resident(b2p.shape),
            resident(w3p.shape), resident(b3p.shape),
            resident(w4p.shape), resident(b4p.shape),
            resident(w5p.shape), resident(b5p.shape),
        ],
        out_specs=pl.BlockSpec((1, TM), lambda i: (0, i)),  # lane-dense (1, TM) rows
        compiler_params=pltpu.CompilerParams(
            dimension_semantics=("parallel",)),  # v7x: batch tiles split across 2 TCs
        cost_estimate=cost,
    )(xp, w1p, b1p, w2p, b2p, w3p, b3p, w4p, b4p, w5p, b5p)

    # Un-pad: real batch entries only; back to the module's (B, 1) shape.
    return out[0, :B].reshape(B, 1)


def init_linear(key, fan_in, fan_out):
    """Mimic PyTorch nn.Linear default init: U(-1/sqrt(fan_in), 1/sqrt(fan_in)).
    Weight stored pre-transposed as (fan_in, fan_out)."""
    kw, kb = jax.random.split(key)
    bound = 1.0 / jnp.sqrt(jnp.float32(fan_in))
    w = jax.random.uniform(kw, (fan_in, fan_out), jnp.float32, -bound, bound)
    b = jax.random.uniform(kb, (1, fan_out), jnp.float32, -bound, bound)
    return w, b


def reference_forward_f32(x, params):
    h = x
    for i, (w, b) in enumerate(params):
        h = h @ w + b
        if i < len(params) - 1:
            h = jnp.maximum(h, 0.0)
    return h


def reference_forward_bf16(x, params):
    """Same math as the kernel (f32 first layer, bf16 matmul inputs + f32 accum after)."""
    (w1, b1) = params[0]
    h = jnp.maximum(x @ w1 + b1, 0.0)
    rest = params[1:]
    for i, (w, b) in enumerate(rest):
        h = jnp.dot(h.astype(jnp.bfloat16), w.astype(jnp.bfloat16),
                    preferred_element_type=jnp.float32) + b
        if i < len(rest) - 1:
            h = jnp.maximum(h, 0.0)
    return h


if __name__ == "__main__":
    key = jax.random.PRNGKey(0)
    keys = jax.random.split(key, 7)

    # Layer dims straight from the module: 2 -> 100 -> 100 -> 100 -> 100 -> 1
    dims = [(2, 100), (100, 100), (100, 100), (100, 100), (100, 1)]
    params = [init_linear(k, fi, fo) for k, (fi, fo) in zip(keys[:5], dims)]

    fwd = jax.jit(net_forward)

    # Case 1: small batch (single exact-size tile, grid = 1).
    x_small = jax.random.normal(keys[5], (8, 2), jnp.float32)
    out_small = jax.block_until_ready(fwd(x_small, params))
    assert out_small.shape == (8, 1)
    assert jnp.allclose(out_small, reference_forward_bf16(x_small, params),
                        atol=2e-3, rtol=2e-3), "small-batch mismatch vs bf16 reference"
    assert jnp.allclose(out_small, reference_forward_f32(x_small, params),
                        atol=3e-2, rtol=3e-2), "small-batch mismatch vs f32 reference"

    # Case 2: batch large enough to exercise the multi-tile, lane-dense-output path
    # (TM = 128, grid = 3, batch padded with zero rows that get sliced off).
    x_big = jax.random.normal(keys[6], (300, 2), jnp.float32)
    out_big = jax.block_until_ready(fwd(x_big, params))
    assert out_big.shape == (300, 1)
    assert jnp.allclose(out_big, reference_forward_bf16(x_big, params),
                        atol=2e-3, rtol=2e-3), "large-batch mismatch vs bf16 reference"
    assert jnp.allclose(out_big, reference_forward_f32(x_big, params),
                        atol=3e-2, rtol=3e-2), "large-batch mismatch vs f32 reference"

    print("KERNEL_OK")
</pallas_src>

<mosaic_0001>
module attributes {stable_mosaic.version = 11 : i64} {
  func.func @mlp_kernel(%arg0: i32, %arg1: memref<8x2xf32, #tpu.memory_space<vmem>>, %arg2: memref<2x128xf32, #tpu.memory_space<vmem>>, %arg3: memref<1x128xf32, #tpu.memory_space<vmem>>, %arg4: memref<128x128xbf16, #tpu.memory_space<vmem>>, %arg5: memref<1x128xf32, #tpu.memory_space<vmem>>, %arg6: memref<128x128xbf16, #tpu.memory_space<vmem>>, %arg7: memref<1x128xf32, #tpu.memory_space<vmem>>, %arg8: memref<128x128xbf16, #tpu.memory_space<vmem>>, %arg9: memref<1x128xf32, #tpu.memory_space<vmem>>, %arg10: memref<128x128xbf16, #tpu.memory_space<vmem>>, %arg11: memref<1x128xf32, #tpu.memory_space<vmem>>, %arg12: memref<1x8xf32, #tpu.memory_space<vmem>>) attributes {dimension_semantics = [#tpu.dimension_semantics<parallel>], iteration_bounds = array<i64: 1>, scalar_prefetch = 0 : i64, scratch_operands = 0 : i64, tpu.core_type = #tpu.core_type<tc>, window_params = [{transform_indices = @transform_0, window_bounds = array<i64: 8, 2>}, {pipeline_mode = #tpu.pipeline_mode<synchronous>, transform_indices = @transform_1, window_bounds = array<i64: 2, 128>}, {pipeline_mode = #tpu.pipeline_mode<synchronous>, transform_indices = @transform_2, window_bounds = array<i64: 1, 128>}, {pipeline_mode = #tpu.pipeline_mode<synchronous>, transform_indices = @transform_3, window_bounds = array<i64: 128, 128>}, {pipeline_mode = #tpu.pipeline_mode<synchronous>, transform_indices = @transform_4, window_bounds = array<i64: 1, 128>}, {pipeline_mode = #tpu.pipeline_mode<synchronous>, transform_indices = @transform_5, window_bounds = array<i64: 128, 128>}, {pipeline_mode = #tpu.pipeline_mode<synchronous>, transform_indices = @transform_6, window_bounds = array<i64: 1, 128>}, {pipeline_mode = #tpu.pipeline_mode<synchronous>, transform_indices = @transform_7, window_bounds = array<i64: 128, 128>}, {pipeline_mode = #tpu.pipeline_mode<synchronous>, transform_indices = @transform_8, window_bounds = array<i64: 1, 128>}, {pipeline_mode = #tpu.pipeline_mode<synchronous>, transform_indices = @transform_9, window_bounds = array<i64: 128, 128>}, {pipeline_mode = #tpu.pipeline_mode<synchronous>, transform_indices = @transform_10, window_bounds = array<i64: 1, 128>}, {transform_indices = @transform_11, window_bounds = array<i64: 1, 8>}]} {
    %c0 = arith.constant 0 : index
    %c0_0 = arith.constant 0 : index
    %0 = vector.load %arg1[%c0, %c0_0] : memref<8x2xf32, #tpu.memory_space<vmem>>, vector<8x2xf32>
    %1 = vector.extract_strided_slice %0 {offsets = [0, 0], sizes = [8, 1], strides = [1, 1]} : vector<8x2xf32> to vector<8x1xf32>
    %c0_1 = arith.constant 0 : index
    %c0_2 = arith.constant 0 : index
    %2 = vector.load %arg2[%c0_1, %c0_2] : memref<2x128xf32, #tpu.memory_space<vmem>>, vector<1x128xf32>
    %3 = vector.broadcast %1 : vector<8x1xf32> to vector<8x128xf32>
    %4 = vector.broadcast %2 : vector<1x128xf32> to vector<8x128xf32>
    %5 = arith.mulf %3, %4 : vector<8x128xf32>
    %6 = vector.extract_strided_slice %0 {offsets = [0, 1], sizes = [8, 1], strides = [1, 1]} : vector<8x2xf32> to vector<8x1xf32>
    %c1 = arith.constant 1 : index
    %c0_3 = arith.constant 0 : index
    %7 = vector.load %arg2[%c1, %c0_3] : memref<2x128xf32, #tpu.memory_space<vmem>>, vector<1x128xf32>
    %8 = vector.broadcast %6 : vector<8x1xf32> to vector<8x128xf32>
    %9 = vector.broadcast %7 : vector<1x128xf32> to vector<8x128xf32>
    %10 = arith.mulf %8, %9 : vector<8x128xf32>
    %11 = arith.addf %5, %10 : vector<8x128xf32>
    %c0_4 = arith.constant 0 : index
    %c0_5 = arith.constant 0 : index
    %12 = vector.load %arg3[%c0_4, %c0_5] : memref<1x128xf32, #tpu.memory_space<vmem>>, vector<1x128xf32>
    %13 = vector.broadcast %12 : vector<1x128xf32> to vector<8x128xf32>
    %14 = arith.addf %11, %13 : vector<8x128xf32>
    %cst = arith.constant 0.000000e+00 : f32
    %15 = vector.broadcast %cst : f32 to vector<8x128xf32>
    %16 = arith.maximumf %14, %15 : vector<8x128xf32>
    %17 = arith.truncf %16 : vector<8x128xf32> to vector<8x128xbf16>
    %c0_6 = arith.constant 0 : index
    %c0_7 = arith.constant 0 : index
    %18 = vector.load %arg4[%c0_6, %c0_7] : memref<128x128xbf16, #tpu.memory_space<vmem>>, vector<128x128xbf16>
    %cst_8 = arith.constant dense<0.000000e+00> : vector<8x128xf32>
    %19 = tpu.matmul %17, %18, %cst_8 {dimension_numbers = #tpu.dot_dimension_numbers<[1], [0], [0], [1], [0, 0, 1, 1], [], []>} : vector<8x128xbf16>, vector<128x128xbf16>, vector<8x128xf32> -> vector<8x128xf32>
    %c0_9 = arith.constant 0 : index
    %c0_10 = arith.constant 0 : index
    %20 = vector.load %arg5[%c0_9, %c0_10] : memref<1x128xf32, #tpu.memory_space<vmem>>, vector<1x128xf32>
    %21 = vector.broadcast %20 : vector<1x128xf32> to vector<8x128xf32>
    %22 = arith.addf %19, %21 : vector<8x128xf32>
    %cst_11 = arith.constant 0.000000e+00 : f32
    %23 = vector.broadcast %cst_11 : f32 to vector<8x128xf32>
    %24 = arith.maximumf %22, %23 : vector<8x128xf32>
    %25 = arith.truncf %24 : vector<8x128xf32> to vector<8x128xbf16>
    %c0_12 = arith.constant 0 : index
    %c0_13 = arith.constant 0 : index
    %26 = vector.load %arg6[%c0_12, %c0_13] : memref<128x128xbf16, #tpu.memory_space<vmem>>, vector<128x128xbf16>
    %cst_14 = arith.constant dense<0.000000e+00> : vector<8x128xf32>
    %27 = tpu.matmul %25, %26, %cst_14 {dimension_numbers = #tpu.dot_dimension_numbers<[1], [0], [0], [1], [0, 0, 1, 1], [], []>} : vector<8x128xbf16>, vector<128x128xbf16>, vector<8x128xf32> -> vector<8x128xf32>
    %c0_15 = arith.constant 0 : index
    %c0_16 = arith.constant 0 : index
    %28 = vector.load %arg7[%c0_15, %c0_16] : memref<1x128xf32, #tpu.memory_space<vmem>>, vector<1x128xf32>
    %29 = vector.broadcast %28 : vector<1x128xf32> to vector<8x128xf32>
    %30 = arith.addf %27, %29 : vector<8x128xf32>
    %cst_17 = arith.constant 0.000000e+00 : f32
    %31 = vector.broadcast %cst_17 : f32 to vector<8x128xf32>
    %32 = arith.maximumf %30, %31 : vector<8x128xf32>
    %33 = arith.truncf %32 : vector<8x128xf32> to vector<8x128xbf16>
    %c0_18 = arith.constant 0 : index
    %c0_19 = arith.constant 0 : index
    %34 = vector.load %arg8[%c0_18, %c0_19] : memref<128x128xbf16, #tpu.memory_space<vmem>>, vector<128x128xbf16>
    %cst_20 = arith.constant dense<0.000000e+00> : vector<8x128xf32>
    %35 = tpu.matmul %33, %34, %cst_20 {dimension_numbers = #tpu.dot_dimension_numbers<[1], [0], [0], [1], [0, 0, 1, 1], [], []>} : vector<8x128xbf16>, vector<128x128xbf16>, vector<8x128xf32> -> vector<8x128xf32>
    %c0_21 = arith.constant 0 : index
    %c0_22 = arith.constant 0 : index
    %36 = vector.load %arg9[%c0_21, %c0_22] : memref<1x128xf32, #tpu.memory_space<vmem>>, vector<1x128xf32>
    %37 = vector.broadcast %36 : vector<1x128xf32> to vector<8x128xf32>
    %38 = arith.addf %35, %37 : vector<8x128xf32>
    %cst_23 = arith.constant 0.000000e+00 : f32
    %39 = vector.broadcast %cst_23 : f32 to vector<8x128xf32>
    %40 = arith.maximumf %38, %39 : vector<8x128xf32>
    %41 = arith.truncf %40 : vector<8x128xf32> to vector<8x128xbf16>
    %c0_24 = arith.constant 0 : index
    %c0_25 = arith.constant 0 : index
    %42 = vector.load %arg10[%c0_24, %c0_25] : memref<128x128xbf16, #tpu.memory_space<vmem>>, vector<128x128xbf16>
    %cst_26 = arith.constant dense<0.000000e+00> : vector<8x128xf32>
    %43 = tpu.matmul %41, %42, %cst_26 {dimension_numbers = #tpu.dot_dimension_numbers<[1], [0], [0], [1], [0, 0, 1, 1], [], []>} : vector<8x128xbf16>, vector<128x128xbf16>, vector<8x128xf32> -> vector<8x128xf32>
    %c0_27 = arith.constant 0 : index
    %c0_28 = arith.constant 0 : index
    %44 = vector.load %arg11[%c0_27, %c0_28] : memref<1x128xf32, #tpu.memory_space<vmem>>, vector<1x128xf32>
    %45 = vector.broadcast %44 : vector<1x128xf32> to vector<8x128xf32>
    %46 = arith.addf %43, %45 : vector<8x128xf32>
    %47 = tpu.transpose %46, [1, 0] : vector<8x128xf32> -> vector<128x8xf32>
    %48 = vector.extract_strided_slice %47 {offsets = [0, 0], sizes = [1, 8], strides = [1, 1]} : vector<128x8xf32> to vector<1x8xf32>
    %c0_29 = arith.constant 0 : index
    %c0_30 = arith.constant 0 : index
    %49 = vector.load %arg12[%c0_29, %c0_30] : memref<1x8xf32, #tpu.memory_space<vmem>>, vector<1x8xf32>
    tpu.vector_store %arg12[%c0_29, %c0_30], %48 {strides = array<i32>} : memref<1x8xf32, #tpu.memory_space<vmem>>, vector<1x8xf32>,
    return
  }
  func.func @transform_0(%arg0: i32) -> (i32, i32) {
    %c0_i32 = arith.constant 0 : i32
    %c0_i32_0 = arith.constant 0 : i32
    return %arg0, %c0_i32 : i32, i32
  }
  func.func @transform_1(%arg0: i32) -> (i32, i32) {
    %c0_i32 = arith.constant 0 : i32
    %c0_i32_0 = arith.constant 0 : i32
    %c0_i32_1 = arith.constant 0 : i32
    return %c0_i32, %c0_i32_0 : i32, i32
  }
  func.func @transform_2(%arg0: i32) -> (i32, i32) {
    %c0_i32 = arith.constant 0 : i32
    %c0_i32_0 = arith.constant 0 : i32
    %c0_i32_1 = arith.constant 0 : i32
    return %c0_i32, %c0_i32_0 : i32, i32
  }
  func.func @transform_3(%arg0: i32) -> (i32, i32) {
    %c0_i32 = arith.constant 0 : i32
    %c0_i32_0 = arith.constant 0 : i32
    %c0_i32_1 = arith.constant 0 : i32
    return %c0_i32, %c0_i32_0 : i32, i32
  }
  func.func @transform_4(%arg0: i32) -> (i32, i32) {
    %c0_i32 = arith.constant 0 : i32
    %c0_i32_0 = arith.constant 0 : i32
    %c0_i32_1 = arith.constant 0 : i32
    return %c0_i32, %c0_i32_0 : i32, i32
  }
  func.func @transform_5(%arg0: i32) -> (i32, i32) {
    %c0_i32 = arith.constant 0 : i32
    %c0_i32_0 = arith.constant 0 : i32
    %c0_i32_1 = arith.constant 0 : i32
    return %c0_i32, %c0_i32_0 : i32, i32
  }
  func.func @transform_6(%arg0: i32) -> (i32, i32) {
    %c0_i32 = arith.constant 0 : i32
    %c0_i32_0 = arith.constant 0 : i32
    %c0_i32_1 = arith.constant 0 : i32
    return %c0_i32, %c0_i32_0 : i32, i32
  }
  func.func @transform_7(%arg0: i32) -> (i32, i32) {
    %c0_i32 = arith.constant 0 : i32
    %c0_i32_0 = arith.constant 0 : i32
    %c0_i32_1 = arith.constant 0 : i32
    return %c0_i32, %c0_i32_0 : i32, i32
  }
  func.func @transform_8(%arg0: i32) -> (i32, i32) {
    %c0_i32 = arith.constant 0 : i32
    %c0_i32_0 = arith.constant 0 : i32
    %c0_i32_1 = arith.constant 0 : i32
    return %c0_i32, %c0_i32_0 : i32, i32
  }
  func.func @transform_9(%arg0: i32) -> (i32, i32) {
    %c0_i32 = arith.constant 0 : i32
    %c0_i32_0 = arith.constant 0 : i32
    %c0_i32_1 = arith.constant 0 : i32
    return %c0_i32, %c0_i32_0 : i32, i32
  }
  func.func @transform_10(%arg0: i32) -> (i32, i32) {
    %c0_i32 = arith.constant 0 : i32
    %c0_i32_0 = arith.constant 0 : i32
    %c0_i32_1 = arith.constant 0 : i32
    return %c0_i32, %c0_i32_0 : i32, i32
  }
  func.func @transform_11(%arg0: i32) -> (i32, i32) {
    %c0_i32 = arith.constant 0 : i32
    %c0_i32_0 = arith.constant 0 : i32
    return %c0_i32, %arg0 : i32, i32
  }
}

</mosaic_0001>

<llo_original>
// kernel: net_forward.1
$region0: #{net_forward.1}
  #allocation0 [shape = 'u32[]', space=smem, size = 0x4, offset = 0x4, fixed_abs, tag = 'smem constant byte address 0x4 - core index']
  #allocation1 [shape = 'u32[72,128]{1,0:T(1,128)}', space=vmem, size = 0x9000, scoped, tag = 'internal scratch']
  %s0 = inlined_call_operand.vmem [shape: f32[8,2], index: 0, kind: input, shape index: {}]
  %s1 = inlined_call_operand.vmem [shape: f32[2,128], index: 1, kind: input, shape index: {}]
  %s2 = inlined_call_operand.vmem [shape: f32[1,128], index: 2, kind: input, shape index: {}]
  %s3 = inlined_call_operand.vmem [shape: bf16[128,128], index: 3, kind: input, shape index: {}]
  %s4 = inlined_call_operand.vmem [shape: f32[1,128], index: 4, kind: input, shape index: {}]
  %s5 = inlined_call_operand.vmem [shape: bf16[128,128], index: 5, kind: input, shape index: {}]
  %s6 = inlined_call_operand.vmem [shape: f32[1,128], index: 6, kind: input, shape index: {}]
  %s7 = inlined_call_operand.vmem [shape: bf16[128,128], index: 7, kind: input, shape index: {}]
  %s8 = inlined_call_operand.vmem [shape: f32[1,128], index: 8, kind: input, shape index: {}]
  %s9 = inlined_call_operand.vmem [shape: bf16[128,128], index: 9, kind: input, shape index: {}]
  %s10 = inlined_call_operand.vmem [shape: f32[1,128], index: 10, kind: input, shape index: {}]
  %s11 = inlined_call_operand.hbm [shape: f32[1,8], index: 11, kind: output, shape index: {}]
  %s12 = sld [smem:[#allocation0]]
  $region54: #{net_forward.1} parent=0
    _
  %s14 = ssub.s32 1, %s12
  %s15 = scalar_select 0, %s14, %s12
  $region1: #{net_forward.1} parent=0
    #allocation2 [shape = 'u8[512]{0}', space=vmem, size = 0x400, scoped, tag = 'output window, operand 0, single buffered']
    #allocation3 [shape = 's32[1]{0}', space=sflag, size = 0x4, scoped, tag = 'scoped memory for net_forward.1']
    %16 = vsyncpa [#allocation3], 0
    // Predicated region
    $region2: #{net_forward.1} parent=1 // pred_check
      _
    $region3: #{net_forward.1} parent=1 // pred_check_branch
      %18 = sbr.rel (0) target = $region5
    $region4: #{net_forward.1} parent=1 // pred_region
      _
    $region5: #{net_forward.1} parent=1 // pred_fallthru
      _
    // Predicated region
    $region6: #{net_forward.1} parent=1 // pred_check
      _
    $region7: #{net_forward.1} parent=1 // pred_check_branch
      %20 = sbr.rel (0) target = $region9
    $region8: #{net_forward.1} parent=1 // pred_region
      _
    $region9: #{net_forward.1} parent=1 // pred_fallthru
      _
    // Predicated region
    $region10: #{net_forward.1} parent=1 // pred_check
      _
    $region11: #{net_forward.1} parent=1 // pred_check_branch
      %22 = sbr.rel (0) target = $region13
    $region12: #{net_forward.1} parent=1 // pred_region
      _
    $region13: #{net_forward.1} parent=1 // pred_fallthru
      _
    // Predicated region
    $region14: #{net_forward.1} parent=1 // pred_check
      _
    $region15: #{net_forward.1} parent=1 // pred_check_branch
      %24 = sbr.rel (0) target = $region17
    $region16: #{net_forward.1} parent=1 // pred_region
      _
    $region17: #{net_forward.1} parent=1 // pred_fallthru
      _
    // Predicated region
    $region18: #{net_forward.1} parent=1 // pred_check
      _
    $region19: #{net_forward.1} parent=1 // pred_check_branch
      %26 = sbr.rel (0) target = $region21
    $region20: #{net_forward.1} parent=1 // pred_region
      _
    $region21: #{net_forward.1} parent=1 // pred_fallthru
      _
    // Predicated region
    $region22: #{net_forward.1} parent=1 // pred_check
      _
    $region23: #{net_forward.1} parent=1 // pred_check_branch
      %28 = sbr.rel (0) target = $region25
    $region24: #{net_forward.1} parent=1 // pred_region
      _
    $region25: #{net_forward.1} parent=1 // pred_fallthru
      _
    // Predicated region
    $region26: #{net_forward.1} parent=1 // pred_check
      _
    $region27: #{net_forward.1} parent=1 // pred_check_branch
      %30 = sbr.rel (0) target = $region29
    $region28: #{net_forward.1} parent=1 // pred_region
      _
    $region29: #{net_forward.1} parent=1 // pred_fallthru
      _
    // Predicated region
    $region30: #{net_forward.1} parent=1 // pred_check
      _
    $region31: #{net_forward.1} parent=1 // pred_check_branch
      %32 = sbr.rel (0) target = $region33
    $region32: #{net_forward.1} parent=1 // pred_region
      _
    $region33: #{net_forward.1} parent=1 // pred_fallthru
      _
    // Predicated region
    $region34: #{net_forward.1} parent=1 // pred_check
      _
    $region35: #{net_forward.1} parent=1 // pred_check_branch
      %34 = sbr.rel (0) target = $region37
    $region36: #{net_forward.1} parent=1 // pred_region
      _
    $region37: #{net_forward.1} parent=1 // pred_fallthru
      _
    // Predicated region
    $region38: #{net_forward.1} parent=1 // pred_check
      _
    $region39: #{net_forward.1} parent=1 // pred_check_branch
      %36 = sbr.rel (0) target = $region41
    $region40: #{net_forward.1} parent=1 // pred_region
      _
    $region41: #{net_forward.1} parent=1 // pred_fallthru
      _
    // Predicated region
    $region42: #{net_forward.1} parent=1 // pred_check
      _
    $region43: #{net_forward.1} parent=1 // pred_check_branch
      %38 = sbr.rel (0) target = $region45
    $region44: #{net_forward.1} parent=1 // pred_region
      _
    $region45: #{net_forward.1} parent=1 // pred_fallthru
      _
    %v39 = vld [vmem:[%s0] sm:$0xff]
    %v40 = vld [vmem:[%s1] sm:$0x1]
    %42 = vset.pattern.permute.xlu0 0
    %43 = vperm.xlu0 %42, %v39
    %v44 = vpop.permute.xlu0 %43
    %v46 = vperm.slane %v40, 0
    %v47 = vmul.f32 %v44, %v46
    %v48 = vld [vmem:[%s1 + $0x1] sm:$0x1]
    %49 = vset.pattern.permute.xlu0 1
    %50 = vperm.xlu0 %49, %v39
    %v51 = vpop.permute.xlu0 %50
    %v53 = vperm.slane %v48, 0
    %v54 = vmul.f32 %v51, %v53
    %v55 = vadd.f32 %v47, %v54
    %v56 = vld [vmem:[%s2] sm:$0x1]
    %v58 = vperm.slane %v56, 0
    %v60 = vadd.f32 %v55, %v58
    %v61 = vmax.f32 %v60, 0.0
    %v62 = vpack.c.bf16 %v61, %v61
    %v63 = vld [vmem:[%s3] sm:$0xf]
    %v64 = vld [vmem:[%s3 + $0x4] sm:$0xf]
    %v65 = vld [vmem:[%s3 + $0x8] sm:$0xf]
    %v66 = vld [vmem:[%s3 + $0xc] sm:$0xf]
    %v67 = vld [vmem:[%s3 + $0x10] sm:$0xf]
    %v68 = vld [vmem:[%s3 + $0x14] sm:$0xf]
    %v69 = vld [vmem:[%s3 + $0x18] sm:$0xf]
    %v70 = vld [vmem:[%s3 + $0x1c] sm:$0xf]
    %v71 = vld [vmem:[%s3 + $0x20] sm:$0xf]
    %v72 = vld [vmem:[%s3 + $0x24] sm:$0xf]
    %v73 = vld [vmem:[%s3 + $0x28] sm:$0xf]
    %v74 = vld [vmem:[%s3 + $0x2c] sm:$0xf]
    %v75 = vld [vmem:[%s3 + $0x30] sm:$0xf]
    %v76 = vld [vmem:[%s3 + $0x34] sm:$0xf]
    %v77 = vld [vmem:[%s3 + $0x38] sm:$0xf]
    %v78 = vld [vmem:[%s3 + $0x3c] sm:$0xf]
    %v79 = vld [vmem:[%s4] sm:$0x1]
    %v81 = vperm.slane %v79, 0
    %v99 = vunpack.c.l.b16 %v63
    %v100 = vunpack.c.l.b16 %v64
    %v101 = vunpack.c.l.b16 %v65
    %v102 = vunpack.c.l.b16 %v66
    %v103 = vunpack.c.l.b16 %v67
    %v104 = vunpack.c.l.b16 %v68
    %v105 = vunpack.c.l.b16 %v69
    %v106 = vunpack.c.l.b16 %v70
    %v107 = vunpack.c.l.b16 %v71
    %v108 = vunpack.c.l.b16 %v72
    %v109 = vunpack.c.l.b16 %v73
    %v110 = vunpack.c.l.b16 %v74
    %v111 = vunpack.c.l.b16 %v75
    %v112 = vunpack.c.l.b16 %v76
    %v113 = vunpack.c.l.b16 %v77
    %v114 = vunpack.c.l.b16 %v78
    %v115 = vpack.c.b16 %v100, %v99
    %v116 = vpack.c.b16 %v102, %v101
    %v117 = vpack.c.b16 %v104, %v103
    %v118 = vpack.c.b16 %v106, %v105
    %v119 = vpack.c.b16 %v108, %v107
    %v120 = vpack.c.b16 %v110, %v109
    %v121 = vpack.c.b16 %v112, %v111
    %v122 = vpack.c.b16 %v114, %v113
    %131 = vmatpush.bf16.msra.mxu0 %v122
    %132 = vmatpush.bf16.msra.mxu0 %v121
    %133 = vmatpush.bf16.msra.mxu0 %v120
    %134 = vmatpush.bf16.msra.mxu0 %v119
    %135 = vmatpush.bf16.msra.mxu0 %v118
    %136 = vmatpush.bf16.msra.mxu0 %v117
    %137 = vmatpush.bf16.msra.mxu0 %v116
    %138 = vmatpush.bf16.msra.mxu0 %v115
    %139 = vmatmul.bf16.gmra.mxu0 %v62
    %v140 = vpop.f32.mrf.mxu0
    %v141 = vadd.f32 %v81, %v140
    %v142 = vpop.f32.mrf.mxu0
    %143 = vdwg.mxu0
    %v144 = vmax.f32 %v141, 0.0
    %v145 = vpack.c.bf16 %v144, %v144
    %v146 = vld [vmem:[%s5] sm:$0xf]
    %v147 = vld [vmem:[%s5 + $0x4] sm:$0xf]
    %v148 = vld [vmem:[%s5 + $0x8] sm:$0xf]
    %v149 = vld [vmem:[%s5 + $0xc] sm:$0xf]
    %v150 = vld [vmem:[%s5 + $0x10] sm:$0xf]
    %v151 = vld [vmem:[%s5 + $0x14] sm:$0xf]
    %v152 = vld [vmem:[%s5 + $0x18] sm:$0xf]
    %v153 = vld [vmem:[%s5 + $0x1c] sm:$0xf]
    %v154 = vld [vmem:[%s5 + $0x20] sm:$0xf]
    %v155 = vld [vmem:[%s5 + $0x24] sm:$0xf]
    %v156 = vld [vmem:[%s5 + $0x28] sm:$0xf]
    %v157 = vld [vmem:[%s5 + $0x2c] sm:$0xf]
    %v158 = vld [vmem:[%s5 + $0x30] sm:$0xf]
    %v159 = vld [vmem:[%s5 + $0x34] sm:$0xf]
    %v160 = vld [vmem:[%s5 + $0x38] sm:$0xf]
    %v161 = vld [vmem:[%s5 + $0x3c] sm:$0xf]
    %v162 = vld [vmem:[%s6] sm:$0x1]
    %v164 = vperm.slane %v162, 0
    %v182 = vunpack.c.l.b16 %v146
    %v183 = vunpack.c.l.b16 %v147
    %v184 = vunpack.c.l.b16 %v148
    %v185 = vunpack.c.l.b16 %v149
    %v186 = vunpack.c.l.b16 %v150
    %v187 = vunpack.c.l.b16 %v151
    %v188 = vunpack.c.l.b16 %v152
    %v189 = vunpack.c.l.b16 %v153
    %v190 = vunpack.c.l.b16 %v154
    %v191 = vunpack.c.l.b16 %v155
    %v192 = vunpack.c.l.b16 %v156
    %v193 = vunpack.c.l.b16 %v157
    %v194 = vunpack.c.l.b16 %v158
    %v195 = vunpack.c.l.b16 %v159
    %v196 = vunpack.c.l.b16 %v160
    %v197 = vunpack.c.l.b16 %v161
    %v198 = vpack.c.b16 %v183, %v182
    %v199 = vpack.c.b16 %v185, %v184
    %v200 = vpack.c.b16 %v187, %v186
    %v201 = vpack.c.b16 %v189, %v188
    %v202 = vpack.c.b16 %v191, %v190
    %v203 = vpack.c.b16 %v193, %v192
    %v204 = vpack.c.b16 %v195, %v194
    %v205 = vpack.c.b16 %v197, %v196
    %214 = vmatpush.bf16.msra.mxu0 %v205
    %215 = vmatpush.bf16.msra.mxu0 %v204
    %216 = vmatpush.bf16.msra.mxu0 %v203
    %217 = vmatpush.bf16.msra.mxu0 %v202
    %218 = vmatpush.bf16.msra.mxu0 %v201
    %219 = vmatpush.bf16.msra.mxu0 %v200
    %220 = vmatpush.bf16.msra.mxu0 %v199
    %221 = vmatpush.bf16.msra.mxu0 %v198
    %222 = vmatmul.bf16.gmra.mxu0 %v145
    %v223 = vpop.f32.mrf.mxu0
    %v224 = vadd.f32 %v164, %v223
    %v225 = vpop.f32.mrf.mxu0
    %226 = vdwg.mxu0
    %v227 = vmax.f32 %v224, 0.0
    %v228 = vpack.c.bf16 %v227, %v227
    %v229 = vld [vmem:[%s7] sm:$0xf]
    %v230 = vld [vmem:[%s7 + $0x4] sm:$0xf]
    %v231 = vld [vmem:[%s7 + $0x8] sm:$0xf]
    %v232 = vld [vmem:[%s7 + $0xc] sm:$0xf]
    %v233 = vld [vmem:[%s7 + $0x10] sm:$0xf]
    %v234 = vld [vmem:[%s7 + $0x14] sm:$0xf]
    %v235 = vld [vmem:[%s7 + $0x18] sm:$0xf]
    %v236 = vld [vmem:[%s7 + $0x1c] sm:$0xf]
    %v237 = vld [vmem:[%s7 + $0x20] sm:$0xf]
    %v238 = vld [vmem:[%s7 + $0x24] sm:$0xf]
    %v239 = vld [vmem:[%s7 + $0x28] sm:$0xf]
    %v240 = vld [vmem:[%s7 + $0x2c] sm:$0xf]
    %v241 = vld [vmem:[%s7 + $0x30] sm:$0xf]
    %v242 = vld [vmem:[%s7 + $0x34] sm:$0xf]
    %v243 = vld [vmem:[%s7 + $0x38] sm:$0xf]
    %v244 = vld [vmem:[%s7 + $0x3c] sm:$0xf]
    %v245 = vld [vmem:[%s8] sm:$0x1]
    %v247 = vperm.slane %v245, 0
    %v265 = vunpack.c.l.b16 %v229
    %v266 = vunpack.c.l.b16 %v230
    %v267 = vunpack.c.l.b16 %v231
    %v268 = vunpack.c.l.b16 %v232
    %v269 = vunpack.c.l.b16 %v233
    %v270 = vunpack.c.l.b16 %v234
    %v271 = vunpack.c.l.b16 %v235
    %v272 = vunpack.c.l.b16 %v236
    %v273 = vunpack.c.l.b16 %v237
    %v274 = vunpack.c.l.b16 %v238
    %v275 = vunpack.c.l.b16 %v239
    %v276 = vunpack.c.l.b16 %v240
    %v277 = vunpack.c.l.b16 %v241
    %v278 = vunpack.c.l.b16 %v242
    %v279 = vunpack.c.l.b16 %v243
    %v280 = vunpack.c.l.b16 %v244
    %v281 = vpack.c.b16 %v266, %v265
    %v282 = vpack.c.b16 %v268, %v267
    %v283 = vpack.c.b16 %v270, %v269
    %v284 = vpack.c.b16 %v272, %v271
    %v285 = vpack.c.b16 %v274, %v273
    %v286 = vpack.c.b16 %v276, %v275
    %v287 = vpack.c.b16 %v278, %v277
    %v288 = vpack.c.b16 %v280, %v279
    %297 = vmatpush.bf16.msra.mxu0 %v288
    %298 = vmatpush.bf16.msra.mxu0 %v287
    %299 = vmatpush.bf16.msra.mxu0 %v286
    %300 = vmatpush.bf16.msra.mxu0 %v285
    %301 = vmatpush.bf16.msra.mxu0 %v284
    %302 = vmatpush.bf16.msra.mxu0 %v283
    %303 = vmatpush.bf16.msra.mxu0 %v282
    %304 = vmatpush.bf16.msra.mxu0 %v281
    %305 = vmatmul.bf16.gmra.mxu0 %v228
    %v306 = vpop.f32.mrf.mxu0
    %v307 = vadd.f32 %v247, %v306
    %v308 = vpop.f32.mrf.mxu0
    %309 = vdwg.mxu0
    %v310 = vmax.f32 %v307, 0.0
    %v311 = vpack.c.bf16 %v310, %v310
    %v312 = vld [vmem:[%s9] sm:$0xf]
    %v313 = vld [vmem:[%s9 + $0x4] sm:$0xf]
    %v314 = vld [vmem:[%s9 + $0x8] sm:$0xf]
    %v315 = vld [vmem:[%s9 + $0xc] sm:$0xf]
    %v316 = vld [vmem:[%s9 + $0x10] sm:$0xf]
    %v317 = vld [vmem:[%s9 + $0x14] sm:$0xf]
    %v318 = vld [vmem:[%s9 + $0x18] sm:$0xf]
    %v319 = vld [vmem:[%s9 + $0x1c] sm:$0xf]
    %v320 = vld [vmem:[%s9 + $0x20] sm:$0xf]
    %v321 = vld [vmem:[%s9 + $0x24] sm:$0xf]
    %v322 = vld [vmem:[%s9 + $0x28] sm:$0xf]
    %v323 = vld [vmem:[%s9 + $0x2c] sm:$0xf]
    %v324 = vld [vmem:[%s9 + $0x30] sm:$0xf]
    %v325 = vld [vmem:[%s9 + $0x34] sm:$0xf]
    %v326 = vld [vmem:[%s9 + $0x38] sm:$0xf]
    %v327 = vld [vmem:[%s9 + $0x3c] sm:$0xf]
    %v328 = vld [vmem:[%s10] sm:$0x1]
    %v330 = vperm.slane %v328, 0
    %v348 = vunpack.c.l.b16 %v312
    %v349 = vunpack.c.l.b16 %v313
    %v350 = vunpack.c.l.b16 %v314
    %v351 = vunpack.c.l.b16 %v315
    %v352 = vunpack.c.l.b16 %v316
    %v353 = vunpack.c.l.b16 %v317
    %v354 = vunpack.c.l.b16 %v318
    %v355 = vunpack.c.l.b16 %v319
    %v356 = vunpack.c.l.b16 %v320
    %v357 = vunpack.c.l.b16 %v321
    %v358 = vunpack.c.l.b16 %v322
    %v359 = vunpack.c.l.b16 %v323
    %v360 = vunpack.c.l.b16 %v324
    %v361 = vunpack.c.l.b16 %v325
    %v362 = vunpack.c.l.b16 %v326
    %v363 = vunpack.c.l.b16 %v327
    %v364 = vpack.c.b16 %v349, %v348
    %v365 = vpack.c.b16 %v351, %v350
    %v366 = vpack.c.b16 %v353, %v352
    %v367 = vpack.c.b16 %v355, %v354
    %v368 = vpack.c.b16 %v357, %v356
    %v369 = vpack.c.b16 %v359, %v358
    %v370 = vpack.c.b16 %v361, %v360
    %v371 = vpack.c.b16 %v363, %v362
    %380 = vmatpush.bf16.msra.mxu0 %v371
    %381 = vmatpush.bf16.msra.mxu0 %v370
    %382 = vmatpush.bf16.msra.mxu0 %v369
    %383 = vmatpush.bf16.msra.mxu0 %v368
    %384 = vmatpush.bf16.msra.mxu0 %v367
    %385 = vmatpush.bf16.msra.mxu0 %v366
    %386 = vmatpush.bf16.msra.mxu0 %v365
    %387 = vmatpush.bf16.msra.mxu0 %v364
    %388 = vmatmul.bf16.gmra.mxu0 %v311
    %v389 = vpop.f32.mrf.mxu0
    %v390 = vadd.f32 %v330, %v389
    %v391 = vpop.f32.mrf.mxu0
    %392 = vdwg.mxu0
    %393 = vxpose.xlu0.b32.start [1/16] %v390, 128
    %394 = vxpose.xlu0.b32.cont [2/16] 0.0, 128
    %395 = vxpose.xlu0.b32.cont [3/16] 0.0, 128
    %396 = vxpose.xlu0.b32.cont [4/16] 0.0, 128
    %397 = vxpose.xlu0.b32.cont [5/16] 0.0, 128
    %398 = vxpose.xlu0.b32.cont [6/16] 0.0, 128
    %399 = vxpose.xlu0.b32.cont [7/16] 0.0, 128
    %400 = vxpose.xlu0.b32.cont [8/16] 0.0, 128
    %401 = vxpose.xlu0.b32.cont [9/16] 0.0, 128
    %402 = vxpose.xlu0.b32.cont [10/16] 0.0, 128
    %403 = vxpose.xlu0.b32.cont [11/16] 0.0, 128
    %404 = vxpose.xlu0.b32.cont [12/16] 0.0, 128
    %405 = vxpose.xlu0.b32.cont [13/16] 0.0, 128
    %406 = vxpose.xlu0.b32.cont [14/16] 0.0, 128
    %407 = vxpose.xlu0.b32.cont [15/16] 0.0, 128
    %408 = vxpose.xlu0.b32.end [16/16] 0.0, 128
    %v409 = vpop.trf.xlu0
    %v410 = vpop.trf.xlu0
    %v411 = vpop.trf.xlu0
    %v412 = vpop.trf.xlu0
    %v413 = vpop.trf.xlu0
    %v414 = vpop.trf.xlu0
    %v415 = vpop.trf.xlu0
    %v416 = vpop.trf.xlu0
    %v417 = vpop.trf.xlu0
    %v418 = vpop.trf.xlu0
    %v419 = vpop.trf.xlu0
    %v420 = vpop.trf.xlu0
    %v421 = vpop.trf.xlu0
    %v422 = vpop.trf.xlu0
    %v423 = vpop.trf.xlu0
    %v424 = vpop.trf.xlu0
    %vm425 = vcmask 57344
    %426 = vst.msk [vmem:[#allocation2] sm:$0x1] %vm425, %v409
    // Predicated region
    $region46: #{net_forward.1} parent=1 // pred_check
      _
    $region47: #{net_forward.1} parent=1 // pred_check_branch
      %428 = sbr.rel (0) target = $region49
    $region48: #{net_forward.1} parent=1 // pred_region
      %430 = vsyncadd [#allocation3], 0
      %s432 = sshll.u32 [#allocation2], 4
      %s433 = int_to_ptr.vmem [resolvable:$true] %s432
      %s434 = sshll.u32 %s11, 4
      %s435 = int_to_ptr.hbm [resolvable:$true] %s434
      %437 = dma.vmem_to_hbm [thread:$0]  %s433, 16, %s435, [#allocation3]
    $region49: #{net_forward.1} parent=1 // pred_fallthru
      _
    // Predicated region
    $region50: #{net_forward.1} parent=1 // pred_check
      _
    $region51: #{net_forward.1} parent=1 // pred_check_branch
      %439 = sbr.rel (0) target = $region53
    $region52: #{net_forward.1} parent=1 // pred_region
      %441 = dma.done [#allocation3], 16
    $region53: #{net_forward.1} parent=1 // pred_fallthru
      _
    %442 = vsyncpa [#allocation3], 1

</llo_original>
